<compile_context>
chip_gen: v7x
topology: tpu7x:2x2x1
jax: 0.10.0
libtpu: 0.0.40
codegen_flags: <defaults>
</compile_context>

<pallas_src>
import functools

import jax
import jax.numpy as jnp
from jax.experimental import pallas as pl
from jax.experimental.pallas import tpu as pltpu


def pyramid_style_kernel(x_ref, w1_ref, b1_ref, w2_ref, b2_ref,
                         w3_ref, b3_ref, w4_ref, b4_ref, o_ref):
    """Fused 4-layer MLP on one batch tile, batch on the lane axis."""
    # One XLU transpose of the streamed tile: [bb, F] -> [F, bb].
    xt = x_ref[...].T

    # Layer 1: [H, F] @ [F, bb] -> [H, bb]   (f32 accumulate)
    h = jnp.dot(w1_ref[...], xt, preferred_element_type=jnp.float32)
    h = jnp.maximum(h + b1_ref[...], 0.0)                     # b1: [H, 1]

    # Layer 2: [F/2, F] @ [F, bb] -> [F/2, bb]   (requires H == F)
    h = jnp.dot(w2_ref[...], h, preferred_element_type=jnp.float32)
    h = jnp.maximum(h + b2_ref[...], 0.0)                     # b2: [F/2, 1]

    # Layer 3: [H/4, F/2] @ [F/2, bb] -> [H/4, bb]
    h = jnp.dot(w3_ref[...], h, preferred_element_type=jnp.float32)
    h = jnp.maximum(h + b3_ref[...], 0.0)                     # b3: [H/4, 1]

    # Layer 4 (N=1) on the VPU/XLU: broadcast-multiply by the [H/4, 1] weight
    # column, reduce over the H/4 sublanes -> lane-dense [1, bb] row.
    out = jnp.sum(h * w4_ref[...], axis=0, keepdims=True)
    o_ref[...] = (out + b4_ref[...]).astype(o_ref.dtype)


def _num_tensorcores():
    """Best-effort TC-per-device count (v7x has 2); fall back to 1."""
    try:
        return max(1, int(getattr(jax.devices()[0], "num_cores", 1)))
    except Exception:  # pragma: no cover - defensive
        return 1


def _pick_batch_tile(B, block_b, n_cores):
    """Single-TC: one tile as large as possible.  Multi-TC: >= n_cores tiles."""
    if n_cores > 1 and B > 128:
        per_core = -(-B // n_cores)              # cdiv
        per_core = -(-per_core // 128) * 128     # round up to a lane multiple
        bb = min(block_b, per_core)
    else:
        bb = min(block_b, B)
    if bb >= B:
        return B                                  # single grid step, full array
    return max(128, (bb // 128) * 128)            # tiled: must be 128-multiple


@functools.partial(jax.jit, static_argnames=("block_b",))
def pyramid_style(x, params, *, block_b=2048):
    """x: [B, F] (f32 or bf16).  params: see init_params().  Returns [B, 1]."""
    B, F = x.shape
    bb = _pick_batch_tile(B, block_b, _num_tensorcores())
    if bb < B:
        assert bb % 128 == 0, "tiled batch block must be a multiple of 128"
    num_tiles = pl.cdiv(B, bb)

    # Only the streamed operands (x, w1) need a matching matmul dtype; no
    # wrapper pass over x.  w1 is tiny so the cast (if any) is negligible.
    w1 = params["w1"].astype(x.dtype)
    w2, w3, w4 = params["w2"], params["w3"], params["w4"]
    b1, b2, b3, b4 = params["b1"], params["b2"], params["b3"], params["b4"]

    H = w1.shape[0]
    flops = 2 * B * (F * H + H * (F // 2) + (F // 2) * (H // 4) + (H // 4))
    param_bytes = sum(int(p.size) * p.dtype.itemsize for p in
                      (w1, b1, w2, b2, w3, b3, w4, b4))
    bytes_accessed = B * F * x.dtype.itemsize + B * x.dtype.itemsize + param_bytes

    def full(arr):
        # Whole (tiny) parameter resident for every batch tile; constant index
        # map so the pipeliner never re-fetches it.
        return pl.BlockSpec(arr.shape, lambda i: (0, 0))

    out_row = pl.pallas_call(
        pyramid_style_kernel,
        out_shape=jax.ShapeDtypeStruct((1, B), x.dtype),
        grid_spec=pltpu.PrefetchScalarGridSpec(
            num_scalar_prefetch=0,
            grid=(num_tiles,),
            in_specs=[
                pl.BlockSpec((bb, F), lambda i: (i, 0)),
                full(w1), full(b1),
                full(w2), full(b2),
                full(w3), full(b3),
                full(w4), full(b4),
            ],
            out_specs=pl.BlockSpec((1, bb), lambda i: (0, i)),
        ),
        compiler_params=pltpu.CompilerParams(
            dimension_semantics=("parallel",)),
        cost_estimate=pl.CostEstimate(flops=flops, transcendentals=0,
                                      bytes_accessed=bytes_accessed),
    )(x, w1, b1, w2, b2, w3, b3, w4, b4)

    # Free layout plumbing: (1, B) lane-dense row -> (B, 1) module output.
    return out_row.reshape(B, 1)


def init_params(key, hidden_size, input_feature):
    """Deterministic init mimicking nn.Linear (uniform +-1/sqrt(fan_in)).

    Storage layouts (torch [out, in] so the kernel does W @ h):
      w1 [H, F],  b1 [H, 1]
      w2 [F/2, F], b2 [F/2, 1]
      w3 [H/4, F/2], b3 [H/4, 1]
      w4 [H/4, 1] (column, used on the VPU), b4 [1, 1]
    """
    F, H = input_feature, hidden_size
    shapes = {
        "w1": (H, F),            "b1": (H, 1),
        "w2": (F // 2, F),       "b2": (F // 2, 1),
        "w3": (H // 4, F // 2),  "b3": (H // 4, 1),
        "w4": (H // 4, 1),       "b4": (1, 1),
    }
    fan_in = {"1": F, "2": F, "3": F // 2, "4": H // 4}
    params = {}
    for name, shape in shapes.items():
        key, sub = jax.random.split(key)
        bound = 1.0 / (fan_in[name[1]] ** 0.5)
        params[name] = jax.random.uniform(sub, shape, jnp.float32, -bound, bound)
    return params


def reference_forward(x, p):
    h = jnp.maximum(x @ p["w1"].T + p["b1"].T, 0.0)
    h = jnp.maximum(h @ p["w2"].T + p["b2"].T, 0.0)
    h = jnp.maximum(h @ p["w3"].T + p["b3"].T, 0.0)
    return h @ p["w4"] + p["b4"]


if __name__ == "__main__":
    # hidden_size must equal input_feature for the torch Sequential to be
    # shape-consistent (layer 2 consumes `input_feature` features).
    hidden_size = 32
    input_feature = 32
    batch = 256

    key = jax.random.PRNGKey(0)
    key, kx = jax.random.split(key)
    x = jax.random.normal(kx, (batch, input_feature), jnp.float32)
    params = init_params(key, hidden_size, input_feature)

    ref = reference_forward(x, params)

    # f32 path (tight tolerance).
    out = jax.block_until_ready(pyramid_style(x, params))
    assert out.shape == (batch, 1), out.shape
    assert jnp.allclose(out, ref, atol=1e-4, rtol=1e-4), \
        f"max err {jnp.max(jnp.abs(out - ref))}"

    # bf16-producer path: x already arrives in bf16, no wrapper cast pass.
    x_bf16 = x.astype(jnp.bfloat16)
    out_bf16 = jax.block_until_ready(pyramid_style(x_bf16, params))
    assert out_bf16.shape == (batch, 1), out_bf16.shape
    assert jnp.allclose(out_bf16.astype(jnp.float32), ref, atol=1e-1, rtol=1e-1), \
        f"max bf16 err {jnp.max(jnp.abs(out_bf16.astype(jnp.float32) - ref))}"

    print("KERNEL_OK")
</pallas_src>

<mosaic_0001>
module attributes {stable_mosaic.version = 11 : i64} {
  func.func @pyramid_style_kernel(%arg0: i32, %arg1: memref<256x32xf32, #tpu.memory_space<vmem>>, %arg2: memref<32x32xf32, #tpu.memory_space<vmem>>, %arg3: memref<32x1xf32, #tpu.memory_space<vmem>>, %arg4: memref<16x32xf32, #tpu.memory_space<vmem>>, %arg5: memref<16x1xf32, #tpu.memory_space<vmem>>, %arg6: memref<8x16xf32, #tpu.memory_space<vmem>>, %arg7: memref<8x1xf32, #tpu.memory_space<vmem>>, %arg8: memref<8x1xf32, #tpu.memory_space<vmem>>, %arg9: memref<1x1xf32, #tpu.memory_space<vmem>>, %arg10: memref<1x256xf32, #tpu.memory_space<vmem>>) attributes {dimension_semantics = [#tpu.dimension_semantics<parallel>], iteration_bounds = array<i64: 1>, scalar_prefetch = 0 : i64, scratch_operands = 0 : i64, tpu.core_type = #tpu.core_type<tc>, window_params = [{transform_indices = @transform_0, window_bounds = array<i64: 256, 32>}, {pipeline_mode = #tpu.pipeline_mode<synchronous>, transform_indices = @transform_1, window_bounds = array<i64: 32, 32>}, {pipeline_mode = #tpu.pipeline_mode<synchronous>, transform_indices = @transform_2, window_bounds = array<i64: 32, 1>}, {pipeline_mode = #tpu.pipeline_mode<synchronous>, transform_indices = @transform_3, window_bounds = array<i64: 16, 32>}, {pipeline_mode = #tpu.pipeline_mode<synchronous>, transform_indices = @transform_4, window_bounds = array<i64: 16, 1>}, {pipeline_mode = #tpu.pipeline_mode<synchronous>, transform_indices = @transform_5, window_bounds = array<i64: 8, 16>}, {pipeline_mode = #tpu.pipeline_mode<synchronous>, transform_indices = @transform_6, window_bounds = array<i64: 8, 1>}, {pipeline_mode = #tpu.pipeline_mode<synchronous>, transform_indices = @transform_7, window_bounds = array<i64: 8, 1>}, {pipeline_mode = #tpu.pipeline_mode<synchronous>, transform_indices = @transform_8, window_bounds = array<i64: 1, 1>}, {transform_indices = @transform_9, window_bounds = array<i64: 1, 256>}]} {
    %c0 = arith.constant 0 : index
    %c0_0 = arith.constant 0 : index
    %0 = vector.load %arg1[%c0, %c0_0] : memref<256x32xf32, #tpu.memory_space<vmem>>, vector<256x32xf32>
    %1 = tpu.transpose %0, [1, 0] : vector<256x32xf32> -> vector<32x256xf32>
    %c0_1 = arith.constant 0 : index
    %c0_2 = arith.constant 0 : index
    %2 = vector.load %arg2[%c0_1, %c0_2] : memref<32x32xf32, #tpu.memory_space<vmem>>, vector<32x32xf32>
    %cst = arith.constant dense<0.000000e+00> : vector<32x256xf32>
    %3 = tpu.matmul %2, %1, %cst {dimension_numbers = #tpu.dot_dimension_numbers<[1], [0], [0], [1], [0, 0, 1, 1], [], []>} : vector<32x32xf32>, vector<32x256xf32>, vector<32x256xf32> -> vector<32x256xf32>
    %c0_3 = arith.constant 0 : index
    %c0_4 = arith.constant 0 : index
    %4 = vector.load %arg3[%c0_3, %c0_4] : memref<32x1xf32, #tpu.memory_space<vmem>>, vector<32x1xf32>
    %5 = vector.broadcast %4 : vector<32x1xf32> to vector<32x256xf32>
    %6 = arith.addf %3, %5 : vector<32x256xf32>
    %cst_5 = arith.constant 0.000000e+00 : f32
    %7 = vector.broadcast %cst_5 : f32 to vector<32x256xf32>
    %8 = arith.maximumf %6, %7 : vector<32x256xf32>
    %c0_6 = arith.constant 0 : index
    %c0_7 = arith.constant 0 : index
    %9 = vector.load %arg4[%c0_6, %c0_7] : memref<16x32xf32, #tpu.memory_space<vmem>>, vector<16x32xf32>
    %cst_8 = arith.constant dense<0.000000e+00> : vector<16x256xf32>
    %10 = tpu.matmul %9, %8, %cst_8 {dimension_numbers = #tpu.dot_dimension_numbers<[1], [0], [0], [1], [0, 0, 1, 1], [], []>} : vector<16x32xf32>, vector<32x256xf32>, vector<16x256xf32> -> vector<16x256xf32>
    %c0_9 = arith.constant 0 : index
    %c0_10 = arith.constant 0 : index
    %11 = vector.load %arg5[%c0_9, %c0_10] : memref<16x1xf32, #tpu.memory_space<vmem>>, vector<16x1xf32>
    %12 = vector.broadcast %11 : vector<16x1xf32> to vector<16x256xf32>
    %13 = arith.addf %10, %12 : vector<16x256xf32>
    %cst_11 = arith.constant 0.000000e+00 : f32
    %14 = vector.broadcast %cst_11 : f32 to vector<16x256xf32>
    %15 = arith.maximumf %13, %14 : vector<16x256xf32>
    %c0_12 = arith.constant 0 : index
    %c0_13 = arith.constant 0 : index
    %16 = vector.load %arg6[%c0_12, %c0_13] : memref<8x16xf32, #tpu.memory_space<vmem>>, vector<8x16xf32>
    %cst_14 = arith.constant dense<0.000000e+00> : vector<8x256xf32>
    %17 = tpu.matmul %16, %15, %cst_14 {dimension_numbers = #tpu.dot_dimension_numbers<[1], [0], [0], [1], [0, 0, 1, 1], [], []>} : vector<8x16xf32>, vector<16x256xf32>, vector<8x256xf32> -> vector<8x256xf32>
    %c0_15 = arith.constant 0 : index
    %c0_16 = arith.constant 0 : index
    %18 = vector.load %arg7[%c0_15, %c0_16] : memref<8x1xf32, #tpu.memory_space<vmem>>, vector<8x1xf32>
    %19 = vector.broadcast %18 : vector<8x1xf32> to vector<8x256xf32>
    %20 = arith.addf %17, %19 : vector<8x256xf32>
    %cst_17 = arith.constant 0.000000e+00 : f32
    %21 = vector.broadcast %cst_17 : f32 to vector<8x256xf32>
    %22 = arith.maximumf %20, %21 : vector<8x256xf32>
    %c0_18 = arith.constant 0 : index
    %c0_19 = arith.constant 0 : index
    %23 = vector.load %arg8[%c0_18, %c0_19] : memref<8x1xf32, #tpu.memory_space<vmem>>, vector<8x1xf32>
    %24 = vector.broadcast %23 : vector<8x1xf32> to vector<8x256xf32>
    %25 = arith.mulf %22, %24 : vector<8x256xf32>
    %cst_20 = arith.constant dense<0.000000e+00> : vector<256xf32>
    %26 = vector.multi_reduction <add>, %25, %cst_20 [0] : vector<8x256xf32> to vector<256xf32>
    %27 = vector.shape_cast %26 : vector<256xf32> to vector<1x256xf32>
    %c0_21 = arith.constant 0 : index
    %c0_22 = arith.constant 0 : index
    %28 = vector.load %arg9[%c0_21, %c0_22] : memref<1x1xf32, #tpu.memory_space<vmem>>, vector<1x1xf32>
    %29 = vector.broadcast %28 : vector<1x1xf32> to vector<1x256xf32>
    %30 = arith.addf %27, %29 : vector<1x256xf32>
    %c0_23 = arith.constant 0 : index
    %c0_24 = arith.constant 0 : index
    %31 = vector.load %arg10[%c0_23, %c0_24] : memref<1x256xf32, #tpu.memory_space<vmem>>, vector<1x256xf32>
    tpu.vector_store %arg10[%c0_23, %c0_24], %30 {strides = array<i32>} : memref<1x256xf32, #tpu.memory_space<vmem>>, vector<1x256xf32>,
    return
  }
  func.func @transform_0(%arg0: i32) -> (i32, i32) {
    %c0_i32 = arith.constant 0 : i32
    %c0_i32_0 = arith.constant 0 : i32
    return %arg0, %c0_i32 : i32, i32
  }
  func.func @transform_1(%arg0: i32) -> (i32, i32) {
    %c0_i32 = arith.constant 0 : i32
    %c0_i32_0 = arith.constant 0 : i32
    %c0_i32_1 = arith.constant 0 : i32
    return %c0_i32, %c0_i32_0 : i32, i32
  }
  func.func @transform_2(%arg0: i32) -> (i32, i32) {
    %c0_i32 = arith.constant 0 : i32
    %c0_i32_0 = arith.constant 0 : i32
    %c0_i32_1 = arith.constant 0 : i32
    return %c0_i32, %c0_i32_0 : i32, i32
  }
  func.func @transform_3(%arg0: i32) -> (i32, i32) {
    %c0_i32 = arith.constant 0 : i32
    %c0_i32_0 = arith.constant 0 : i32
    %c0_i32_1 = arith.constant 0 : i32
    return %c0_i32, %c0_i32_0 : i32, i32
  }
  func.func @transform_4(%arg0: i32) -> (i32, i32) {
    %c0_i32 = arith.constant 0 : i32
    %c0_i32_0 = arith.constant 0 : i32
    %c0_i32_1 = arith.constant 0 : i32
    return %c0_i32, %c0_i32_0 : i32, i32
  }
  func.func @transform_5(%arg0: i32) -> (i32, i32) {
    %c0_i32 = arith.constant 0 : i32
    %c0_i32_0 = arith.constant 0 : i32
    %c0_i32_1 = arith.constant 0 : i32
    return %c0_i32, %c0_i32_0 : i32, i32
  }
  func.func @transform_6(%arg0: i32) -> (i32, i32) {
    %c0_i32 = arith.constant 0 : i32
    %c0_i32_0 = arith.constant 0 : i32
    %c0_i32_1 = arith.constant 0 : i32
    return %c0_i32, %c0_i32_0 : i32, i32
  }
  func.func @transform_7(%arg0: i32) -> (i32, i32) {
    %c0_i32 = arith.constant 0 : i32
    %c0_i32_0 = arith.constant 0 : i32
    %c0_i32_1 = arith.constant 0 : i32
    return %c0_i32, %c0_i32_0 : i32, i32
  }
  func.func @transform_8(%arg0: i32) -> (i32, i32) {
    %c0_i32 = arith.constant 0 : i32
    %c0_i32_0 = arith.constant 0 : i32
    %c0_i32_1 = arith.constant 0 : i32
    return %c0_i32, %c0_i32_0 : i32, i32
  }
  func.func @transform_9(%arg0: i32) -> (i32, i32) {
    %c0_i32 = arith.constant 0 : i32
    %c0_i32_0 = arith.constant 0 : i32
    return %c0_i32, %arg0 : i32, i32
  }
}

</mosaic_0001>

<llo_original>
// kernel: pyramid_style.1
$region0: #{pyramid_style.1}
  #allocation0 [shape = 'u32[]', space=smem, size = 0x4, offset = 0x4, fixed_abs, tag = 'smem constant byte address 0x4 - core index']
  #allocation1 [shape = 'u32[144,128]{1,0:T(1,128)}', space=vmem, size = 0x12000, scoped, tag = 'internal scratch']
  #allocation2 [shape = 'f32[1,1]{1,0:T(1,128)S(1)}', space=vmem, size = 0x200, scoped, tag = 'scoped memory for pyramid_style.1']
  %s0 = inlined_call_operand.vmem [shape: f32[256,32], index: 0, kind: input, shape index: {}]
  %s1 = inlined_call_operand.vmem [shape: f32[32,32], index: 1, kind: input, shape index: {}]
  %s2 = inlined_call_operand.vmem [shape: f32[32,1], index: 2, kind: input, shape index: {}]
  %s3 = inlined_call_operand.vmem [shape: f32[16,32], index: 3, kind: input, shape index: {}]
  %s4 = inlined_call_operand.vmem [shape: f32[16,1], index: 4, kind: input, shape index: {}]
  %s5 = inlined_call_operand.vmem [shape: f32[8,16], index: 5, kind: input, shape index: {}]
  %s6 = inlined_call_operand.vmem [shape: f32[8,1], index: 6, kind: input, shape index: {}]
  %s7 = inlined_call_operand.vmem [shape: f32[8,1], index: 7, kind: input, shape index: {}]
  %s8 = inlined_call_operand.<no memory space> [shape: f32[1,1], index: 8, kind: input, shape index: {}]
  %s9 = inlined_call_operand.hbm [shape: f32[1,256], index: 9, kind: output, shape index: {}]
  %s10 = sld [smem:[#allocation0]]
  $region46: #{pyramid_style.1} parent=0
    _
  %s12 = ssub.s32 1, %s10
  %s13 = scalar_select 0, %s12, %s10
  %v14 = vstv %s8
  %15 = vst [vmem:[#allocation2] sm:$0x1] %v14
  $region1: #{pyramid_style.1} parent=0
    #allocation3 [shape = 'u8[1024]{0}', space=vmem, size = 0x400, scoped, tag = 'output window, operand 0, single buffered']
    #allocation4 [shape = 's32[1]{0}', space=sflag, size = 0x4, scoped, tag = 'scoped memory for pyramid_style.1']
    %16 = vsyncpa [#allocation4], 0
    // Predicated region
    $region2: #{pyramid_style.1} parent=1 // pred_check
      _
    $region3: #{pyramid_style.1} parent=1 // pred_check_branch
      %18 = sbr.rel (0) target = $region5
    $region4: #{pyramid_style.1} parent=1 // pred_region
      _
    $region5: #{pyramid_style.1} parent=1 // pred_fallthru
      _
    // Predicated region
    $region6: #{pyramid_style.1} parent=1 // pred_check
      _
    $region7: #{pyramid_style.1} parent=1 // pred_check_branch
      %20 = sbr.rel (0) target = $region9
    $region8: #{pyramid_style.1} parent=1 // pred_region
      _
    $region9: #{pyramid_style.1} parent=1 // pred_fallthru
      _
    // Predicated region
    $region10: #{pyramid_style.1} parent=1 // pred_check
      _
    $region11: #{pyramid_style.1} parent=1 // pred_check_branch
      %22 = sbr.rel (0) target = $region13
    $region12: #{pyramid_style.1} parent=1 // pred_region
      _
    $region13: #{pyramid_style.1} parent=1 // pred_fallthru
      _
    // Predicated region
    $region14: #{pyramid_style.1} parent=1 // pred_check
      _
    $region15: #{pyramid_style.1} parent=1 // pred_check_branch
      %24 = sbr.rel (0) target = $region17
    $region16: #{pyramid_style.1} parent=1 // pred_region
      _
    $region17: #{pyramid_style.1} parent=1 // pred_fallthru
      _
    // Predicated region
    $region18: #{pyramid_style.1} parent=1 // pred_check
      _
    $region19: #{pyramid_style.1} parent=1 // pred_check_branch
      %26 = sbr.rel (0) target = $region21
    $region20: #{pyramid_style.1} parent=1 // pred_region
      _
    $region21: #{pyramid_style.1} parent=1 // pred_fallthru
      _
    // Predicated region
    $region22: #{pyramid_style.1} parent=1 // pred_check
      _
    $region23: #{pyramid_style.1} parent=1 // pred_check_branch
      %28 = sbr.rel (0) target = $region25
    $region24: #{pyramid_style.1} parent=1 // pred_region
      _
    $region25: #{pyramid_style.1} parent=1 // pred_fallthru
      _
    // Predicated region
    $region26: #{pyramid_style.1} parent=1 // pred_check
      _
    $region27: #{pyramid_style.1} parent=1 // pred_check_branch
      %30 = sbr.rel (0) target = $region29
    $region28: #{pyramid_style.1} parent=1 // pred_region
      _
    $region29: #{pyramid_style.1} parent=1 // pred_fallthru
      _
    // Predicated region
    $region30: #{pyramid_style.1} parent=1 // pred_check
      _
    $region31: #{pyramid_style.1} parent=1 // pred_check_branch
      %32 = sbr.rel (0) target = $region33
    $region32: #{pyramid_style.1} parent=1 // pred_region
      _
    $region33: #{pyramid_style.1} parent=1 // pred_fallthru
      _
    // Predicated region
    $region34: #{pyramid_style.1} parent=1 // pred_check
      _
    $region35: #{pyramid_style.1} parent=1 // pred_check_branch
      %34 = sbr.rel (0) target = $region37
    $region36: #{pyramid_style.1} parent=1 // pred_region
      _
    $region37: #{pyramid_style.1} parent=1 // pred_fallthru
      _
    %v35 = vld [vmem:[%s0] sm:$0xff]
    %v36 = vld [vmem:[%s0 + $0x8] sm:$0xff]
    %v37 = vld [vmem:[%s0 + $0x10] sm:$0xff]
    %v38 = vld [vmem:[%s0 + $0x18] sm:$0xff]
    %v39 = vld [vmem:[%s0 + $0x20] sm:$0xff]
    %v40 = vld [vmem:[%s0 + $0x28] sm:$0xff]
    %v41 = vld [vmem:[%s0 + $0x30] sm:$0xff]
    %v42 = vld [vmem:[%s0 + $0x38] sm:$0xff]
    %v43 = vld [vmem:[%s0 + $0x40] sm:$0xff]
    %v44 = vld [vmem:[%s0 + $0x48] sm:$0xff]
    %v45 = vld [vmem:[%s0 + $0x50] sm:$0xff]
    %v46 = vld [vmem:[%s0 + $0x58] sm:$0xff]
    %v47 = vld [vmem:[%s0 + $0x60] sm:$0xff]
    %v48 = vld [vmem:[%s0 + $0x68] sm:$0xff]
    %v49 = vld [vmem:[%s0 + $0x70] sm:$0xff]
    %v50 = vld [vmem:[%s0 + $0x78] sm:$0xff]
    %v51 = vld [vmem:[%s0 + $0x80] sm:$0xff]
    %v52 = vld [vmem:[%s0 + $0x88] sm:$0xff]
    %v53 = vld [vmem:[%s0 + $0x90] sm:$0xff]
    %v54 = vld [vmem:[%s0 + $0x98] sm:$0xff]
    %v55 = vld [vmem:[%s0 + $0xa0] sm:$0xff]
    %v56 = vld [vmem:[%s0 + $0xa8] sm:$0xff]
    %v57 = vld [vmem:[%s0 + $0xb0] sm:$0xff]
    %v58 = vld [vmem:[%s0 + $0xb8] sm:$0xff]
    %v59 = vld [vmem:[%s0 + $0xc0] sm:$0xff]
    %v60 = vld [vmem:[%s0 + $0xc8] sm:$0xff]
    %v61 = vld [vmem:[%s0 + $0xd0] sm:$0xff]
    %v62 = vld [vmem:[%s0 + $0xd8] sm:$0xff]
    %v63 = vld [vmem:[%s0 + $0xe0] sm:$0xff]
    %v64 = vld [vmem:[%s0 + $0xe8] sm:$0xff]
    %v65 = vld [vmem:[%s0 + $0xf0] sm:$0xff]
    %v66 = vld [vmem:[%s0 + $0xf8] sm:$0xff]
    %v67 = vld [vmem:[%s1] sm:$0xff]
    %v68 = vld [vmem:[%s1 + $0x8] sm:$0xff]
    %v69 = vld [vmem:[%s1 + $0x10] sm:$0xff]
    %v70 = vld [vmem:[%s1 + $0x18] sm:$0xff]
    %v71 = vld [vmem:[%s2] sm:$0xff]
    %v72 = vld [vmem:[%s2 + $0x8] sm:$0xff]
    %v73 = vld [vmem:[%s2 + $0x10] sm:$0xff]
    %v74 = vld [vmem:[%s2 + $0x18] sm:$0xff]
    %76 = vset.pattern.permute.xlu0 0
    %77 = vperm.xlu0 %76, %v71
    %v78 = vpop.permute.xlu0 %77
    %81 = vset.pattern.permute.xlu0 0
    %82 = vperm.xlu0 %81, %v72
    %v83 = vpop.permute.xlu0 %82
    %86 = vset.pattern.permute.xlu0 0
    %87 = vperm.xlu0 %86, %v73
    %v88 = vpop.permute.xlu0 %87
    %91 = vset.pattern.permute.xlu0 0
    %92 = vperm.xlu0 %91, %v74
    %v93 = vpop.permute.xlu0 %92
    %vm95 = vcmask 261120
    %v97 = vsel %vm95, %v67, 0
    %v100 = vsel %vm95, %v68, 0
    %v103 = vsel %vm95, %v69, 0
    %v106 = vsel %vm95, %v70, 0
    %v109 = vsel %vm95, %v35, 0
    %v112 = vsel %vm95, %v36, 0
    %v115 = vsel %vm95, %v37, 0
    %v118 = vsel %vm95, %v38, 0
    %v121 = vsel %vm95, %v39, 0
    %v124 = vsel %vm95, %v40, 0
    %v127 = vsel %vm95, %v41, 0
    %v130 = vsel %vm95, %v42, 0
    %v133 = vsel %vm95, %v43, 0
    %v136 = vsel %vm95, %v44, 0
    %v139 = vsel %vm95, %v45, 0
    %v142 = vsel %vm95, %v46, 0
    %v145 = vsel %vm95, %v47, 0
    %v148 = vsel %vm95, %v48, 0
    %v151 = vsel %vm95, %v49, 0
    %v154 = vsel %vm95, %v50, 0
    %v157 = vsel %vm95, %v51, 0
    %v160 = vsel %vm95, %v52, 0
    %v163 = vsel %vm95, %v53, 0
    %v166 = vsel %vm95, %v54, 0
    %v169 = vsel %vm95, %v55, 0
    %v172 = vsel %vm95, %v56, 0
    %v175 = vsel %vm95, %v57, 0
    %v178 = vsel %vm95, %v58, 0
    %v181 = vsel %vm95, %v59, 0
    %v184 = vsel %vm95, %v60, 0
    %v187 = vsel %vm95, %v61, 0
    %v190 = vsel %vm95, %v62, 0
    %v193 = vsel %vm95, %v63, 0
    %v196 = vsel %vm95, %v64, 0
    %v199 = vsel %vm95, %v65, 0
    %v202 = vsel %vm95, %v66, 0
    %204 = vmatprep.subr.mxu0 0.0
    %205 = vmatpush1.xpose.msra.mxu0 %v109
    %206 = vmatprep.subr.mxu0 0.0
    %207 = vmatpush1.xpose.msra.mxu0 %v112
    %208 = vmatprep.subr.mxu0 0.0
    %209 = vmatpush1.xpose.msra.mxu0 %v115
    %210 = vmatprep.subr.mxu0 0.0
    %211 = vmatpush1.xpose.msra.mxu0 %v118
    %212 = vmatprep.subr.mxu0 0.0
    %213 = vmatpush1.xpose.msra.mxu0 %v121
    %214 = vmatprep.subr.mxu0 0.0
    %215 = vmatpush1.xpose.msra.mxu0 %v124
    %216 = vmatprep.subr.mxu0 0.0
    %217 = vmatpush1.xpose.msra.mxu0 %v127
    %218 = vmatprep.subr.mxu0 0.0
    %219 = vmatpush1.xpose.msra.mxu0 %v130
    %220 = vmatprep.subr.mxu0 0.0
    %221 = vmatpush1.xpose.msra.mxu0 %v133
    %222 = vmatprep.subr.mxu0 0.0
    %223 = vmatpush1.xpose.msra.mxu0 %v136
    %224 = vmatprep.subr.mxu0 0.0
    %225 = vmatpush1.xpose.msra.mxu0 %v139
    %226 = vmatprep.subr.mxu0 0.0
    %227 = vmatpush1.xpose.msra.mxu0 %v142
    %228 = vmatprep.subr.mxu0 0.0
    %229 = vmatpush1.xpose.msra.mxu0 %v145
    %230 = vmatprep.subr.mxu0 0.0
    %231 = vmatpush1.xpose.msra.mxu0 %v148
    %232 = vmatprep.subr.mxu0 0.0
    %233 = vmatpush1.xpose.msra.mxu0 %v151
    %234 = vmatprep.subr.mxu0 0.0
    %235 = vmatpush1.xpose.msra.mxu0 %v154
    %236 = vmatprep.subr.mxu0 0.0
    %237 = vmatpush1.xpose.msra.mxu0 %v157
    %238 = vmatprep.subr.mxu0 0.0
    %239 = vmatpush1.xpose.msra.mxu0 %v160
    %240 = vmatprep.subr.mxu0 0.0
    %241 = vmatpush1.xpose.msra.mxu0 %v163
    %242 = vmatprep.subr.mxu0 0.0
    %243 = vmatpush1.xpose.msra.mxu0 %v166
    %244 = vmatprep.subr.mxu0 0.0
    %245 = vmatpush1.xpose.msra.mxu0 %v169
    %246 = vmatprep.subr.mxu0 0.0
    %247 = vmatpush1.xpose.msra.mxu0 %v172
    %248 = vmatprep.subr.mxu0 0.0
    %249 = vmatpush1.xpose.msra.mxu0 %v175
    %250 = vmatprep.subr.mxu0 0.0
    %251 = vmatpush1.xpose.msra.mxu0 %v178
    %252 = vmatprep.subr.mxu0 0.0
    %253 = vmatpush1.xpose.msra.mxu0 %v181
    %254 = vmatprep.subr.mxu0 0.0
    %255 = vmatpush1.xpose.msra.mxu0 %v184
    %256 = vmatprep.subr.mxu0 0.0
    %257 = vmatpush1.xpose.msra.mxu0 %v187
    %258 = vmatprep.subr.mxu0 0.0
    %259 = vmatpush1.xpose.msra.mxu0 %v190
    %260 = vmatprep.subr.mxu0 0.0
    %261 = vmatpush1.xpose.msra.mxu0 %v193
    %262 = vmatprep.subr.mxu0 0.0
    %263 = vmatpush1.xpose.msra.mxu0 %v196
    %264 = vmatprep.subr.mxu0 0.0
    %265 = vmatpush1.xpose.msra.mxu0 %v199
    %266 = vmatprep.subr.mxu0 0.0
    %267 = vmatpush1.xpose.msra.mxu0 %v202
    %268 = vmatprep.mubr.f32.mxu0 0.0
    %269 = vmatmul.mubr.f32.gmra.mrb[0].mxu0 %v97
    %v270 = vpop.f32.mrb[0].mxu0
    %v271 = vadd.f32 %v78, %v270
    %v272 = vpop.f32.mrb[0].mxu0
    %v273 = vadd.f32 %v78, %v272
    %274 = vmatprep.mubr.f32.mxu0 0.0
    %275 = vmatmul.mubr.f32.gmra.mrb[0].mxu0 %v100
    %v276 = vpop.f32.mrb[0].mxu0
    %v277 = vadd.f32 %v83, %v276
    %v278 = vpop.f32.mrb[0].mxu0
    %v279 = vadd.f32 %v83, %v278
    %280 = vmatprep.mubr.f32.mxu0 0.0
    %281 = vmatmul.mubr.f32.gmra.mrb[0].mxu0 %v103
    %v282 = vpop.f32.mrb[0].mxu0
    %v283 = vadd.f32 %v88, %v282
    %v284 = vpop.f32.mrb[0].mxu0
    %v285 = vadd.f32 %v88, %v284
    %286 = vmatprep.mubr.f32.mxu0 0.0
    %287 = vmatmul.mubr.f32.gmra.mrb[0].mxu0 %v106
    %v288 = vpop.f32.mrb[0].mxu0
    %v289 = vadd.f32 %v93, %v288
    %v290 = vpop.f32.mrb[0].mxu0
    %v291 = vadd.f32 %v93, %v290
    %292 = vdwg.mxu0
    %v293 = vmax.f32 %v271, 0.0
    %v294 = vmax.f32 %v273, 0.0
    %v295 = vmax.f32 %v277, 0.0
    %v296 = vmax.f32 %v279, 0.0
    %v297 = vmax.f32 %v283, 0.0
    %v298 = vmax.f32 %v285, 0.0
    %v299 = vmax.f32 %v289, 0.0
    %v300 = vmax.f32 %v291, 0.0
    %v301 = vld [vmem:[%s3] sm:$0xff]
    %v302 = vld [vmem:[%s3 + $0x8] sm:$0xff]
    %v303 = vld [vmem:[%s4] sm:$0xff]
    %v304 = vld [vmem:[%s4 + $0x8] sm:$0xff]
    %306 = vset.pattern.permute.xlu0 0
    %307 = vperm.xlu0 %306, %v303
    %v308 = vpop.permute.xlu0 %307
    %311 = vset.pattern.permute.xlu0 0
    %312 = vperm.xlu0 %311, %v304
    %v313 = vpop.permute.xlu0 %312
    %v316 = vsel %vm95, %v301, 0
    %v319 = vsel %vm95, %v302, 0
    %321 = vmatprep.subr.mxu0 %v294
    %322 = vmatpush1.msra.mxu0 %v293
    %323 = vmatprep.subr.mxu0 %v296
    %324 = vmatpush1.msra.mxu0 %v295
    %325 = vmatprep.subr.mxu0 %v298
    %326 = vmatpush1.msra.mxu0 %v297
    %327 = vmatprep.subr.mxu0 %v300
    %328 = vmatpush1.msra.mxu0 %v299
    %329 = vmatprep.subr.mxu0 0.0
    %330 = vmatpush1.msra.mxu0 0.0
    %331 = vmatprep.subr.mxu0 0.0
    %332 = vmatpush1.msra.mxu0 0.0
    %333 = vmatprep.subr.mxu0 0.0
    %334 = vmatpush1.msra.mxu0 0.0
    %335 = vmatprep.subr.mxu0 0.0
    %336 = vmatpush1.msra.mxu0 0.0
    %337 = vmatprep.subr.mxu0 0.0
    %338 = vmatpush1.msra.mxu0 0.0
    %339 = vmatprep.subr.mxu0 0.0
    %340 = vmatpush1.msra.mxu0 0.0
    %341 = vmatprep.subr.mxu0 0.0
    %342 = vmatpush1.msra.mxu0 0.0
    %343 = vmatprep.subr.mxu0 0.0
    %344 = vmatpush1.msra.mxu0 0.0
    %345 = vmatprep.subr.mxu0 0.0
    %346 = vmatpush1.msra.mxu0 0.0
    %347 = vmatprep.subr.mxu0 0.0
    %348 = vmatpush1.msra.mxu0 0.0
    %349 = vmatprep.subr.mxu0 0.0
    %350 = vmatpush1.msra.mxu0 0.0
    %351 = vmatprep.subr.mxu0 0.0
    %352 = vmatpush1.msra.mxu0 0.0
    %353 = vmatprep.subr.mxu0 0.0
    %354 = vmatpush1.msra.mxu0 0.0
    %355 = vmatprep.subr.mxu0 0.0
    %356 = vmatpush1.msra.mxu0 0.0
    %357 = vmatprep.subr.mxu0 0.0
    %358 = vmatpush1.msra.mxu0 0.0
    %359 = vmatprep.subr.mxu0 0.0
    %360 = vmatpush1.msra.mxu0 0.0
    %361 = vmatprep.subr.mxu0 0.0
    %362 = vmatpush1.msra.mxu0 0.0
    %363 = vmatprep.subr.mxu0 0.0
    %364 = vmatpush1.msra.mxu0 0.0
    %365 = vmatprep.subr.mxu0 0.0
    %366 = vmatpush1.msra.mxu0 0.0
    %367 = vmatprep.subr.mxu0 0.0
    %368 = vmatpush1.msra.mxu0 0.0
    %369 = vmatprep.subr.mxu0 0.0
    %370 = vmatpush1.msra.mxu0 0.0
    %371 = vmatprep.subr.mxu0 0.0
    %372 = vmatpush1.msra.mxu0 0.0
    %373 = vmatprep.subr.mxu0 0.0
    %374 = vmatpush1.msra.mxu0 0.0
    %375 = vmatprep.subr.mxu0 0.0
    %376 = vmatpush1.msra.mxu0 0.0
    %377 = vmatprep.subr.mxu0 0.0
    %378 = vmatpush1.msra.mxu0 0.0
    %379 = vmatprep.subr.mxu0 0.0
    %380 = vmatpush1.msra.mxu0 0.0
    %381 = vmatprep.subr.mxu0 0.0
    %382 = vmatpush1.msra.mxu0 0.0
    %383 = vmatprep.subr.mxu0 0.0
    %384 = vmatpush1.msra.mxu0 0.0
    %385 = vmatprep.mubr.f32.mxu0 0.0
    %386 = vmatmul.mubr.f32.gmra.mrb[0].mxu0 %v316
    %v387 = vpop.f32.mrb[0].mxu0
    %v388 = vadd.f32 %v308, %v387
    %v389 = vpop.f32.mrb[0].mxu0
    %v390 = vadd.f32 %v308, %v389
    %391 = vmatprep.mubr.f32.mxu0 0.0
    %392 = vmatmul.mubr.f32.gmra.mrb[0].mxu0 %v319
    %v393 = vpop.f32.mrb[0].mxu0
    %v394 = vadd.f32 %v313, %v393
    %v395 = vpop.f32.mrb[0].mxu0
    %v396 = vadd.f32 %v313, %v395
    %397 = vdwg.mxu0
    %v398 = vmax.f32 %v388, 0.0
    %v399 = vmax.f32 %v390, 0.0
    %v400 = vmax.f32 %v394, 0.0
    %v401 = vmax.f32 %v396, 0.0
    %v402 = vld [vmem:[%s5] sm:$0xff]
    %v403 = vld [vmem:[%s6] sm:$0xff]
    %405 = vset.pattern.permute.xlu0 0
    %406 = vperm.xlu0 %405, %v403
    %v407 = vpop.permute.xlu0 %406
    %vm409 = vcmask 130048
    %v411 = vsel %vm409, %v402, 0
    %413 = vmatprep.subr.mxu0 %v399
    %414 = vmatpush1.msra.mxu0 %v398
    %415 = vmatprep.subr.mxu0 %v401
    %416 = vmatpush1.msra.mxu0 %v400
    %417 = vmatprep.subr.mxu0 0.0
    %418 = vmatpush1.msra.mxu0 0.0
    %419 = vmatprep.subr.mxu0 0.0
    %420 = vmatpush1.msra.mxu0 0.0
    %421 = vmatprep.subr.mxu0 0.0
    %422 = vmatpush1.msra.mxu0 0.0
    %423 = vmatprep.subr.mxu0 0.0
    %424 = vmatpush1.msra.mxu0 0.0
    %425 = vmatprep.subr.mxu0 0.0
    %426 = vmatpush1.msra.mxu0 0.0
    %427 = vmatprep.subr.mxu0 0.0
    %428 = vmatpush1.msra.mxu0 0.0
    %429 = vmatprep.subr.mxu0 0.0
    %430 = vmatpush1.msra.mxu0 0.0
    %431 = vmatprep.subr.mxu0 0.0
    %432 = vmatpush1.msra.mxu0 0.0
    %433 = vmatprep.subr.mxu0 0.0
    %434 = vmatpush1.msra.mxu0 0.0
    %435 = vmatprep.subr.mxu0 0.0
    %436 = vmatpush1.msra.mxu0 0.0
    %437 = vmatprep.subr.mxu0 0.0
    %438 = vmatpush1.msra.mxu0 0.0
    %439 = vmatprep.subr.mxu0 0.0
    %440 = vmatpush1.msra.mxu0 0.0
    %441 = vmatprep.subr.mxu0 0.0
    %442 = vmatpush1.msra.mxu0 0.0
    %443 = vmatprep.subr.mxu0 0.0
    %444 = vmatpush1.msra.mxu0 0.0
    %445 = vmatprep.subr.mxu0 0.0
    %446 = vmatpush1.msra.mxu0 0.0
    %447 = vmatprep.subr.mxu0 0.0
    %448 = vmatpush1.msra.mxu0 0.0
    %449 = vmatprep.subr.mxu0 0.0
    %450 = vmatpush1.msra.mxu0 0.0
    %451 = vmatprep.subr.mxu0 0.0
    %452 = vmatpush1.msra.mxu0 0.0
    %453 = vmatprep.subr.mxu0 0.0
    %454 = vmatpush1.msra.mxu0 0.0
    %455 = vmatprep.subr.mxu0 0.0
    %456 = vmatpush1.msra.mxu0 0.0
    %457 = vmatprep.subr.mxu0 0.0
    %458 = vmatpush1.msra.mxu0 0.0
    %459 = vmatprep.subr.mxu0 0.0
    %460 = vmatpush1.msra.mxu0 0.0
    %461 = vmatprep.subr.mxu0 0.0
    %462 = vmatpush1.msra.mxu0 0.0
    %463 = vmatprep.subr.mxu0 0.0
    %464 = vmatpush1.msra.mxu0 0.0
    %465 = vmatprep.subr.mxu0 0.0
    %466 = vmatpush1.msra.mxu0 0.0
    %467 = vmatprep.subr.mxu0 0.0
    %468 = vmatpush1.msra.mxu0 0.0
    %469 = vmatprep.subr.mxu0 0.0
    %470 = vmatpush1.msra.mxu0 0.0
    %471 = vmatprep.subr.mxu0 0.0
    %472 = vmatpush1.msra.mxu0 0.0
    %473 = vmatprep.subr.mxu0 0.0
    %474 = vmatpush1.msra.mxu0 0.0
    %475 = vmatprep.subr.mxu0 0.0
    %476 = vmatpush1.msra.mxu0 0.0
    %477 = vmatprep.mubr.f32.mxu0 0.0
    %478 = vmatmul.mubr.f32.gmra.mrb[0].mxu0 %v411
    %v479 = vpop.f32.mrb[0].mxu0
    %v480 = vadd.f32 %v407, %v479
    %v481 = vpop.f32.mrb[0].mxu0
    %v482 = vadd.f32 %v407, %v481
    %483 = vdwg.mxu0
    %v484 = vmax.f32 %v480, 0.0
    %v485 = vmax.f32 %v482, 0.0
    %v486 = vld [vmem:[%s7] sm:$0xff]
    %488 = vset.pattern.permute.xlu0 0
    %489 = vperm.xlu0 %488, %v486
    %v490 = vpop.permute.xlu0 %489
    %v492 = vmul.f32 %v484, %v490
    %v493 = vmul.f32 %v485, %v490
    %v494 = vrot.slane %v492, 4
    %v495 = vadd.f32 %v492, %v494
    %v496 = vrot.slane %v495, 2
    %v497 = vadd.f32 %v495, %v496
    %v498 = vrot.slane %v497, 1
    %v499 = vadd.f32 %v497, %v498
    %v500 = vrot.slane %v493, 4
    %v501 = vadd.f32 %v493, %v500
    %v502 = vrot.slane %v501, 2
    %v503 = vadd.f32 %v501, %v502
    %v504 = vrot.slane %v503, 1
    %v505 = vadd.f32 %v503, %v504
    %v506 = vld [vmem:[#allocation2] sm:$0x1]
    %508 = vset.pattern.permute.xlu0 0
    %509 = vperm.xlu0 %508, %v506
    %v510 = vpop.permute.xlu0 %509
    %v512 = vlaneseq
    %v513 = vshrl.u32 %v512, 7
    %v514 = vsub.s32 0, %v513
    %v515 = vrot.slane %v510, %v514
    %v516 = vadd.f32 %v499, %v515
    %v517 = vadd.f32 %v505, %v515
    %v520 = vcombine.low %v516, %v517
    %v522 = vunpack.c.l.s4 1966171168
    %v523 = vunpack.c.0.s8 %v522
    %v524 = vlaneseq
    %v525 = vshrl.u32 %v524, 7
    %v526 = vsub.s32 %v523, %v525
    %v527 = vrot.slane %v520, %v526
    %v529 = vunpack.c.l.s4 1966171168
    %v530 = vunpack.c.0.s8 %v529
    %v531 = vlaneseq
    %v532 = vshrl.u32 %v531, 7
    %v533 = vsub.s32 %v530, %v532
    %v534 = vrot.slane %v527, %v533
    %v536 = vlaneseq
    %vm537 = vcmp.ge.s32.totalorder %v536, 0
    %vm538 = vcmp.lt.s32.totalorder %v536, 256
    %vm539 = vmand %vm537, %vm538
    %540 = vst.msk [vmem:[#allocation3] sm:$0x3] %vm539, %v534
    // Predicated region
    $region38: #{pyramid_style.1} parent=1 // pred_check
      _
    $region39: #{pyramid_style.1} parent=1 // pred_check_branch
      %542 = sbr.rel (0) target = $region41
    $region40: #{pyramid_style.1} parent=1 // pred_region
      %s544 = ssub.s32 32, 32
      %545 = vsyncadd [#allocation4], %s544
      %s547 = sshll.u32 [#allocation3], 4
      %s548 = int_to_ptr.vmem [resolvable:$true] %s547
      %550 = dma.vmem_to_hbm [thread:$0]  %s548, 32, %s9, [#allocation4]
    $region41: #{pyramid_style.1} parent=1 // pred_fallthru
      _
    // Predicated region
    $region42: #{pyramid_style.1} parent=1 // pred_check
      _
    $region43: #{pyramid_style.1} parent=1 // pred_check_branch
      %552 = sbr.rel (0) target = $region45
    $region44: #{pyramid_style.1} parent=1 // pred_region
      %553 = dma.done [#allocation4], 32
    $region45: #{pyramid_style.1} parent=1 // pred_fallthru
      _
    %554 = vsyncpa [#allocation4], 1

</llo_original>
